<compile_context>
chip_gen: v6e
topology: v6e:2x2x1
jax: 0.10.0
libtpu: 0.0.40
codegen_flags: <defaults>
</compile_context>

<pallas_src>
import numpy as np
import jax
import jax.numpy as jnp
from jax.experimental import pallas as pl
from jax.experimental.pallas import tpu as pltpu


# ----------------------------------------------------------------------------
# Tunables (sized for the smallest generation: v7x = 64 MiB VMEM / 32 MiB scoped).
# ----------------------------------------------------------------------------
_VMEM_LIMIT_BYTES = 32 * 1024 * 1024
_VMEM_BLOCK_BUDGET = 10 * 1024 * 1024   # double-buffered block budget per call
_MAX_CHANNEL_BLOCK = 32                 # review: C_blk ~ 8-32
_LANE_TILE_CANDIDATES = (2048, 1024, 512, 256, 128)


# ----------------------------------------------------------------------------
# Coordinate generation (mirrors BevDecoder._gen_coords, kept separable)
# ----------------------------------------------------------------------------
def get_min_max_coords(size):
    min_x = -size[1] + size[2] / 2.0
    max_x = size[1] - size[2] / 2.0
    min_y = -size[0] + size[2] / 2.0
    max_y = size[0] - size[2] / 2.0
    return min_x, max_x, min_y, max_y


def gen_sample_positions(bev_size, task_size):
    """1-D absolute BEV-pixel sample positions.  x varies only with the task column,
    y only with the task row -> the bilinear grid_sample is separable."""
    _, bev_max_x, _, bev_max_y = get_min_max_coords(bev_size)
    bev_W = int(bev_size[1] * 2 / bev_size[2])
    bev_H = int(bev_size[0] * 2 / bev_size[2])
    t_min_x, t_max_x, t_min_y, t_max_y = get_min_max_coords(task_size)
    task_W = int(task_size[1] * 2 / task_size[2])
    task_H = int(task_size[0] * 2 / task_size[2])

    x = np.linspace(t_min_x, t_max_x, task_W) / bev_max_x
    y = np.linspace(t_min_y, t_max_y, task_H) / bev_max_y
    x = (x + 1.0) * ((bev_W - 1) / 2.0)
    y = (y + 1.0) * ((bev_H - 1) / 2.0)
    # TODO(synk): hat's `adjust_coords` (hardware offset adjustment) not available; identity.
    return x.astype(np.float64), y.astype(np.float64), (bev_H, bev_W), (task_H, task_W)


def build_1d_interp_matrix(pos, src_size):
    """1-D bilinear interpolation (padding_mode='zeros') as a small dense matrix
    of shape (len(pos), src_size) with at most 2 nonzeros per row."""
    m = pos.shape[0]
    A = np.zeros((m, src_size), dtype=np.float32)
    p0 = np.floor(pos)
    frac = pos - p0
    rows = np.arange(m)
    for tap, w in ((p0, 1.0 - frac), (p0 + 1.0, frac)):
        valid = (tap >= 0) & (tap <= src_size - 1)
        idx = np.clip(tap, 0, src_size - 1).astype(np.int64)
        np.add.at(A, (rows[valid], idx[valid]), w[valid].astype(np.float32))
    return A


# ----------------------------------------------------------------------------
# Small helpers
# ----------------------------------------------------------------------------
def _largest_divisor_leq(n, cap):
    cap = max(1, min(n, cap))
    for d in range(cap, 0, -1):
        if n % d == 0:
            return d
    return 1


def _pick_lane_tile(s, c_in, c_out, itemsize=4):
    """Largest lane-dense (multiple-of-128) tile <= s that fits the VMEM budget;
    falls back to the full extent when s < 128 (masked stores unavoidable)."""
    for t in _LANE_TILE_CANDIDATES:
        if t <= s and 2 * (c_in + c_out) * t * itemsize <= _VMEM_BLOCK_BUDGET:
            return t
    return s


def _prefer_x_first(bev_H, bev_W, task_H, task_W):
    # flops/channel:  x-first ~ bev_H*task_W*(bev_W + task_H)
    #                 y-first ~ task_H*bev_W*(bev_H + task_W)
    return bev_H * task_W * (bev_W + task_H) <= task_H * bev_W * (bev_H + task_W)


def _resample_plane(plane, sy, sxt, x_first, cdt):
    """Separable bilinear resample of one (bev_H, bev_W) plane -> (task_H, task_W) f32."""
    if x_first:
        t = jnp.dot(plane, sxt, preferred_element_type=jnp.float32)       # (bev_H, task_W)
        return jnp.dot(sy, t.astype(cdt), preferred_element_type=jnp.float32)
    t = jnp.dot(sy, plane, preferred_element_type=jnp.float32)            # (task_H, bev_W)
    return jnp.dot(t.astype(cdt), sxt, preferred_element_type=jnp.float32)


# ----------------------------------------------------------------------------
# Kernel 1: separable bilinear resample, C_blk channels per grid step.
# ----------------------------------------------------------------------------
def _make_resample_kernel(c_blk, x_first, cdt, with_bias):
    def _per_channel(feat_ref, sy_ref, sxt_ref, out_ref, add_bias):
        sy = sy_ref[...]
        sxt = sxt_ref[...]
        for c in range(c_blk):                                    # unrolled
            plane = feat_ref[0, c].astype(cdt)                    # cast in-kernel
            r = _resample_plane(plane, sy, sxt, x_first, cdt)     # f32
            out_ref[0, c] = add_bias(r, c).astype(out_ref.dtype)

    if with_bias:
        def kernel(feat_ref, sy_ref, sxt_ref, b_ref, out_ref):
            cb = pl.program_id(1)
            _per_channel(feat_ref, sy_ref, sxt_ref, out_ref,
                         lambda r, c: r + b_ref[cb * c_blk + c])
    else:
        def kernel(feat_ref, sy_ref, sxt_ref, out_ref):
            _per_channel(feat_ref, sy_ref, sxt_ref, out_ref, lambda r, c: r)
    return kernel


def _resample(feat, sy, sxt, bias, *, compute_dtype, out_dtype):
    """feat (N,C,bev_H,bev_W) -> (N,C,task_H,task_W); optional per-channel bias is
    added in the final store (used when the resample is the last op)."""
    N, C, bev_H, bev_W = feat.shape
    task_H, task_W = sy.shape[0], sxt.shape[1]
    in_item = feat.dtype.itemsize
    out_item = np.dtype(out_dtype).itemsize

    per_ch = 2 * (bev_H * bev_W * in_item + task_H * task_W * out_item)   # dbl-buffered
    cap = int(max(1, min(_MAX_CHANNEL_BLOCK, _VMEM_BLOCK_BUDGET // max(per_ch, 1))))
    c_blk = _largest_divisor_leq(C, cap)
    x_first = _prefer_x_first(bev_H, bev_W, task_H, task_W)

    in_specs = [
        # TODO(synk): sweep pipeline_mode=pl.Buffered(3) here if DMA is still exposed
        # after channel batching.
        pl.BlockSpec((1, c_blk, bev_H, bev_W), lambda n, cb: (n, cb, 0, 0)),
        pl.BlockSpec((task_H, bev_H), lambda n, cb: (0, 0)),
        pl.BlockSpec((bev_W, task_W), lambda n, cb: (0, 0)),
    ]
    args = [feat, sy.astype(compute_dtype), sxt.astype(compute_dtype)]
    if bias is not None:
        in_specs.append(pl.BlockSpec(memory_space=pltpu.MemorySpace.SMEM))
        args.append(bias.astype(jnp.float32))

    if x_first:
        per_ch_flops = 2 * (bev_H * bev_W * task_W + task_H * bev_H * task_W)
    else:
        per_ch_flops = 2 * (task_H * bev_H * bev_W + task_H * bev_W * task_W)
    flops = N * C * per_ch_flops
    bytes_accessed = (feat.size * in_item + N * C * task_H * task_W * out_item
                      + (sy.size + sxt.size) * np.dtype(compute_dtype).itemsize)

    return pl.pallas_call(
        _make_resample_kernel(c_blk, x_first, compute_dtype, bias is not None),
        out_shape=jax.ShapeDtypeStruct((N, C, task_H, task_W), out_dtype),
        grid_spec=pltpu.PrefetchScalarGridSpec(
            num_scalar_prefetch=0,
            grid=(N, C // c_blk),
            in_specs=in_specs,
            out_specs=pl.BlockSpec((1, c_blk, task_H, task_W),
                                   lambda n, cb: (n, cb, 0, 0)),
        ),
        compiler_params=pltpu.CompilerParams(
            dimension_semantics=("parallel", "parallel"),
            vmem_limit_bytes=_VMEM_LIMIT_BYTES),
        cost_estimate=pl.CostEstimate(flops=int(flops), transcendentals=0,
                                      bytes_accessed=int(bytes_accessed)),
    )(*args)


# ----------------------------------------------------------------------------
# Kernel 2: 1x1 conv (head), lane-dense tiles, bias folded when it is the last op.
# ----------------------------------------------------------------------------
def _make_conv_kernel(cdt, with_bias):
    if with_bias:
        def kernel(x_ref, w_ref, b_ref, out_ref):
            y = jnp.dot(w_ref[...], x_ref[0].astype(cdt),
                        preferred_element_type=jnp.float32)       # (C_out, T) f32
            out_ref[0] = (y + b_ref[...]).astype(out_ref.dtype)
    else:
        def kernel(x_ref, w_ref, out_ref):
            y = jnp.dot(w_ref[...], x_ref[0].astype(cdt),
                        preferred_element_type=jnp.float32)
            out_ref[0] = y.astype(out_ref.dtype)
    return kernel


def _conv1x1(x, w, bias, *, compute_dtype, out_dtype):
    """x (N,C_in,S) -> (N,C_out,S): shared-weight 1x1 conv as lane-tiled matmuls."""
    N, C_in, S = x.shape
    C_out = w.shape[0]
    T = _pick_lane_tile(S, C_in, C_out)
    n_t = pl.cdiv(S, T)     # partial last tile: clipped reads, masked stores only there

    in_specs = [
        pl.BlockSpec((1, C_in, T), lambda n, j: (n, 0, j)),
        pl.BlockSpec((C_out, C_in), lambda n, j: (0, 0)),
    ]
    args = [x, w.astype(compute_dtype)]
    if bias is not None:
        in_specs.append(pl.BlockSpec((C_out, 1), lambda n, j: (0, 0)))
        args.append(bias.astype(jnp.float32).reshape(C_out, 1))

    flops = 2 * N * C_out * C_in * S
    bytes_accessed = (x.size * x.dtype.itemsize
                      + w.size * np.dtype(compute_dtype).itemsize
                      + N * C_out * S * np.dtype(out_dtype).itemsize)

    return pl.pallas_call(
        _make_conv_kernel(compute_dtype, bias is not None),
        out_shape=jax.ShapeDtypeStruct((N, C_out, S), out_dtype),
        grid_spec=pltpu.PrefetchScalarGridSpec(
            num_scalar_prefetch=0,
            grid=(N, n_t),
            in_specs=in_specs,
            out_specs=pl.BlockSpec((1, C_out, T), lambda n, j: (n, 0, j)),
        ),
        compiler_params=pltpu.CompilerParams(
            dimension_semantics=("parallel", "parallel"),
            vmem_limit_bytes=_VMEM_LIMIT_BYTES),
        cost_estimate=pl.CostEstimate(flops=int(flops), transcendentals=0,
                                      bytes_accessed=int(bytes_accessed)),
    )(*args)


# ----------------------------------------------------------------------------
# Kernel 3: fully fused grid_sample + 1x1 conv + bias (single pallas_call).
# Exact reference op order; no intermediate ever written to HBM.
# ----------------------------------------------------------------------------
def _make_fused_kernel(c_in, c_out, x_first, cdt):
    def kernel(feat_ref, sy_ref, sxt_ref, w_ref, b_ref, out_ref):
        sy = sy_ref[...]
        sxt = sxt_ref[...]
        sampled = []
        for i in range(c_in):                                     # MXU resample
            plane = feat_ref[0, i].astype(cdt)
            sampled.append(_resample_plane(plane, sy, sxt, x_first, cdt))   # f32
        # 1x1 conv + bias on the small task-resolution maps: w/b are SMEM scalars,
        # the mix runs on the VPU and hides under the MXU work above.
        for o in range(c_out):
            acc = sampled[0] * w_ref[o, 0]
            for i in range(1, c_in):
                acc = acc + sampled[i] * w_ref[o, i]
            out_ref[0, o] = (acc + b_ref[o]).astype(out_ref.dtype)
    return kernel


def _use_fused(feat, sy, sxt, c_out):
    _, C_in, bev_H, bev_W = feat.shape
    task_H, task_W = sy.shape[0], sxt.shape[1]
    feat_block = 2 * C_in * bev_H * bev_W * feat.dtype.itemsize   # double-buffered input
    live = C_in * task_H * task_W * 4                             # f32 sampled maps
    return (c_out <= C_in                                         # keep VPU mix cheap
            and C_in <= 64 and C_in * c_out <= 1024               # unroll sanity
            and feat_block + live <= _VMEM_BLOCK_BUDGET)          # v7x-safe VMEM


def _fused_forward(feat, sy, sxt, w, b, *, compute_dtype, out_dtype):
    N, C_in, bev_H, bev_W = feat.shape
    C_out = w.shape[0]
    task_H, task_W = sy.shape[0], sxt.shape[1]
    x_first = _prefer_x_first(bev_H, bev_W, task_H, task_W)

    if x_first:
        per_ch_flops = 2 * (bev_H * bev_W * task_W + task_H * bev_H * task_W)
    else:
        per_ch_flops = 2 * (task_H * bev_H * bev_W + task_H * bev_W * task_W)
    flops = N * (C_in * per_ch_flops + 2 * C_in * C_out * task_H * task_W)
    bytes_accessed = (feat.size * feat.dtype.itemsize
                      + N * C_out * task_H * task_W * np.dtype(out_dtype).itemsize)

    return pl.pallas_call(
        _make_fused_kernel(C_in, C_out, x_first, compute_dtype),
        out_shape=jax.ShapeDtypeStruct((N, C_out, task_H, task_W), out_dtype),
        grid_spec=pltpu.PrefetchScalarGridSpec(
            num_scalar_prefetch=0,
            # NOTE: for production N==1 on v7x prefer the two-kernel path, whose
            # (N, C//C_blk) grid keeps both TensorCores busy.
            grid=(N,),
            in_specs=[
                pl.BlockSpec((1, C_in, bev_H, bev_W), lambda n: (n, 0, 0, 0)),
                pl.BlockSpec((task_H, bev_H), lambda n: (0, 0)),
                pl.BlockSpec((bev_W, task_W), lambda n: (0, 0)),
                pl.BlockSpec(memory_space=pltpu.MemorySpace.SMEM),   # conv weight
                pl.BlockSpec(memory_space=pltpu.MemorySpace.SMEM),   # conv bias
            ],
            out_specs=pl.BlockSpec((1, C_out, task_H, task_W),
                                   lambda n: (n, 0, 0, 0)),
        ),
        compiler_params=pltpu.CompilerParams(
            dimension_semantics=("parallel",),
            vmem_limit_bytes=_VMEM_LIMIT_BYTES),
        cost_estimate=pl.CostEstimate(flops=int(flops), transcendentals=0,
                                      bytes_accessed=int(bytes_accessed)),
    )(feat, sy.astype(compute_dtype), sxt.astype(compute_dtype),
      w.astype(jnp.float32), b.astype(jnp.float32))


# ----------------------------------------------------------------------------
# Wrapper: full BevDecoder forward (inference branch)
# ----------------------------------------------------------------------------
def bev_decoder_forward(feat_nchw, sy, sxt, w_head, b_head, *,
                        compute_dtype=jnp.float32, allow_fused=True):
    """grid_sample (separable bilinear, zeros padding) + 1x1-conv head + bias.
    sy/sxt may be None (bev_size == task_size -> the module skips grid_sample).
    compute_dtype=f32 (exact) by default; bf16 keeps f32 MXU accumulation and is
    cast in-kernel (no HBM cast copy)."""
    N, C_in, bev_H, bev_W = feat_nchw.shape
    C_out = w_head.shape[0]
    out_dtype = feat_nchw.dtype

    if sy is None or sxt is None:
        pred = _conv1x1(feat_nchw.reshape(N, C_in, bev_H * bev_W), w_head, b_head,
                        compute_dtype=compute_dtype, out_dtype=out_dtype)
        return pred.reshape(N, C_out, bev_H, bev_W)

    task_H, task_W = sy.shape[0], sxt.shape[1]
    bev_S, task_S = bev_H * bev_W, task_H * task_W

    if allow_fused and _use_fused(feat_nchw, sy, sxt, C_out):
        return _fused_forward(feat_nchw, sy, sxt, w_head, b_head,
                              compute_dtype=compute_dtype, out_dtype=out_dtype)

    # Two-kernel path: order chosen to minimize the HBM intermediate (the op is
    # HBM-bound, so intermediate traffic -- not MXU flops -- decides).
    conv_first = C_out * bev_S < C_in * task_S
    if conv_first:
        # 1x1 conv (no bias) -> resample (+bias folded into its final store).
        # Linear parts commute exactly; bias must be applied after the resample to
        # match grid_sample's zero-padding semantics.
        mixed = _conv1x1(feat_nchw.reshape(N, C_in, bev_S), w_head, None,
                         compute_dtype=compute_dtype, out_dtype=compute_dtype)
        mixed = mixed.reshape(N, C_out, bev_H, bev_W)
        pred = _resample(mixed, sy, sxt, b_head,
                         compute_dtype=compute_dtype, out_dtype=out_dtype)
    else:
        # Reference order: resample -> 1x1 conv (+bias).
        sampled = _resample(feat_nchw, sy, sxt, None,
                            compute_dtype=compute_dtype, out_dtype=compute_dtype)
        pred = _conv1x1(sampled.reshape(N, C_in, task_S), w_head, b_head,
                        compute_dtype=compute_dtype, out_dtype=out_dtype)
        pred = pred.reshape(N, C_out, task_H, task_W)
    # _post_process (inference): external decoder module -> identity.
    # TODO(synk): external `decoder`/`target`/loss modules are not part of this kernel.
    return pred


# ----------------------------------------------------------------------------
# Reference (numpy float64, dense bilinear matrix, reference op order)
# ----------------------------------------------------------------------------
def build_dense_bilinear_matrix(coords, bev_H, bev_W):
    task_H, task_W, _ = coords.shape
    x = coords[..., 0].reshape(-1).astype(np.float64)
    y = coords[..., 1].reshape(-1).astype(np.float64)
    n_out = task_H * task_W
    S = np.zeros((n_out, bev_H * bev_W), dtype=np.float64)
    x0 = np.floor(x); y0 = np.floor(y)
    x1 = x0 + 1.0; y1 = y0 + 1.0
    wx1 = x - x0; wx0 = 1.0 - wx1
    wy1 = y - y0; wy0 = 1.0 - wy1
    rows = np.arange(n_out)
    for xi, yi, wxi, wyi in ((x0, y0, wx0, wy0), (x1, y0, wx1, wy0),
                             (x0, y1, wx0, wy1), (x1, y1, wx1, wy1)):
        valid = (xi >= 0) & (xi < bev_W) & (yi >= 0) & (yi < bev_H)
        xi_c = np.clip(xi, 0, bev_W - 1).astype(np.int64)
        yi_c = np.clip(yi, 0, bev_H - 1).astype(np.int64)
        idx = yi_c * bev_W + xi_c
        w = wxi * wyi
        np.add.at(S, (rows[valid], idx[valid]), w[valid])
    return S


def bev_decoder_reference(feat, x_pos, y_pos, bev_hw, task_hw, w_head, b_head):
    bev_H, bev_W = bev_hw
    task_H, task_W = task_hw
    N, C_in = feat.shape[0], feat.shape[1]
    coords = np.stack([np.tile(x_pos[None, :], (task_H, 1)),
                       np.tile(y_pos[:, None], (1, task_W))], axis=-1)
    S = build_dense_bilinear_matrix(coords, bev_H, bev_W)
    feat64 = np.asarray(feat, np.float64).reshape(N, C_in, bev_H * bev_W)
    sampled = np.einsum("ncb,tb->nct", feat64, S)
    pred = (np.einsum("oc,nct->not", np.asarray(w_head, np.float64), sampled)
            + np.asarray(b_head, np.float64)[None, :, None])
    return pred.reshape(N, w_head.shape[0], task_H, task_W)


def bev_decoder_reference_noresample(feat, w_head, b_head):
    feat64 = np.asarray(feat, np.float64)
    pred = np.einsum("oc,nchw->nohw", np.asarray(w_head, np.float64), feat64)
    return pred + np.asarray(b_head, np.float64)[None, :, None, None]


# ----------------------------------------------------------------------------
# Demo / correctness check
# ----------------------------------------------------------------------------
if __name__ == "__main__":
    N, C_in = 2, 8
    bev_size = (8.0, 8.0, 1.0)                  # -> 16 x 16 bev feature
    bev_H = int(bev_size[0] * 2 / bev_size[2])
    bev_W = int(bev_size[1] * 2 / bev_size[2])

    key = jax.random.PRNGKey(0)
    k_feat, k_w, k_b = jax.random.split(key, 3)
    feat = jax.random.normal(k_feat, (N, C_in, bev_H, bev_W), dtype=jnp.float32)
    feats = [feat]                               # feats[task_feat_index]
    task_feat_index = 0
    feat_in = feats[task_feat_index]

    # (name, task_size, C_out, allow_fused):
    #   same_size : bev == task -> module skips grid_sample (conv-only kernel + bias)
    #   task_a    : 16x16 fractional taps, C_out < C_in -> fully fused kernel
    #   task_a_2k : same geometry, fused disabled -> conv-first two-kernel path
    #   task_b    : 20x20 with out-of-range taps (zero padding), C_out > C_in
    #               -> resample-first two-kernel path (reference order, S=400 cdiv tiles)
    tasks = [
        ("same_size", None, 6, True),
        ("task_a", (4.0, 4.0, 0.5), 4, True),
        ("task_a_2k", (4.0, 4.0, 0.5), 4, False),
        ("task_b", (10.0, 10.0, 1.0), 16, True),
    ]

    wkeys = jax.random.split(k_w, len(tasks))
    bkeys = jax.random.split(k_b, len(tasks))

    for ti, (name, task_size, C_out, allow_fused) in enumerate(tasks):
        w_head = jax.random.normal(wkeys[ti], (C_out, C_in), dtype=jnp.float32) * 0.1
        b_head = jax.random.normal(bkeys[ti], (C_out,), dtype=jnp.float32) * 0.1

        if task_size is None or tuple(task_size) == tuple(bev_size):
            sy = sxt = None
            tH, tW = bev_H, bev_W
            ref = bev_decoder_reference_noresample(feat_in, w_head, b_head)
        else:
            x_pos, y_pos, (bH, bW), (tH, tW) = gen_sample_positions(bev_size, task_size)
            sy = jnp.asarray(build_1d_interp_matrix(y_pos, bH))                           # (tH, bH)
            sxt = jnp.asarray(np.ascontiguousarray(build_1d_interp_matrix(x_pos, bW).T))  # (bW, tW)
            ref = bev_decoder_reference(feat_in, x_pos, y_pos, (bH, bW), (tH, tW),
                                        w_head, b_head)

        # Exact f32 path (default).
        pred_f32 = jax.block_until_ready(
            bev_decoder_forward(feat_in, sy, sxt, w_head, b_head,
                                compute_dtype=jnp.float32, allow_fused=allow_fused))
        assert pred_f32.shape == (N, C_out, tH, tW), (name, pred_f32.shape)
        np.testing.assert_allclose(np.asarray(pred_f32), ref, rtol=1e-5, atol=1e-5)

        # bf16 compute path (f32 MXU accumulation, cast in-kernel); looser tolerance.
        pred_bf16 = jax.block_until_ready(
            bev_decoder_forward(feat_in, sy, sxt, w_head, b_head,
                                compute_dtype=jnp.bfloat16, allow_fused=allow_fused))
        assert pred_bf16.shape == (N, C_out, tH, tW), (name, pred_bf16.shape)
        np.testing.assert_allclose(np.asarray(pred_bf16), ref, rtol=2e-2, atol=2e-2)

    print("KERNEL_OK")
</pallas_src>

<mosaic_0001>
module attributes {stable_mosaic.version = 11 : i64} {
  func.func @kernel(%arg0: i32, %arg1: i32, %arg2: memref<1x8x256xf32, #tpu.memory_space<vmem>>, %arg3: memref<6x8xf32, #tpu.memory_space<vmem>>, %arg4: memref<6x1xf32, #tpu.memory_space<vmem>>, %arg5: memref<1x6x256xf32, #tpu.memory_space<vmem>>) attributes {dimension_semantics = [#tpu.dimension_semantics<parallel>, #tpu.dimension_semantics<parallel>], iteration_bounds = array<i64: 2, 1>, scalar_prefetch = 0 : i64, scratch_operands = 0 : i64, tpu.core_type = #tpu.core_type<tc>, window_params = [{transform_indices = @transform_0, window_bounds = array<i64: 1, 8, 256>}, {pipeline_mode = #tpu.pipeline_mode<synchronous>, transform_indices = @transform_1, window_bounds = array<i64: 6, 8>}, {pipeline_mode = #tpu.pipeline_mode<synchronous>, transform_indices = @transform_2, window_bounds = array<i64: 6, 1>}, {transform_indices = @transform_3, window_bounds = array<i64: 1, 6, 256>}]} {
    %c0 = arith.constant 0 : index
    %c0_0 = arith.constant 0 : index
    %0 = vector.load %arg3[%c0, %c0_0] : memref<6x8xf32, #tpu.memory_space<vmem>>, vector<6x8xf32>
    %c0_1 = arith.constant 0 : index
    %c0_2 = arith.constant 0 : index
    %c0_3 = arith.constant 0 : index
    %1 = vector.load %arg2[%c0_1, %c0_2, %c0_3] : memref<1x8x256xf32, #tpu.memory_space<vmem>>, vector<1x8x256xf32>
    %2 = vector.shape_cast %1 : vector<1x8x256xf32> to vector<8x256xf32>
    %cst = arith.constant dense<0.000000e+00> : vector<6x256xf32>
    %3 = tpu.matmul %0, %2, %cst {dimension_numbers = #tpu.dot_dimension_numbers<[1], [0], [0], [1], [0, 0, 1, 1], [], []>} : vector<6x8xf32>, vector<8x256xf32>, vector<6x256xf32> -> vector<6x256xf32>
    %c0_4 = arith.constant 0 : index
    %c0_5 = arith.constant 0 : index
    %4 = vector.load %arg4[%c0_4, %c0_5] : memref<6x1xf32, #tpu.memory_space<vmem>>, vector<6x1xf32>
    %5 = vector.broadcast %4 : vector<6x1xf32> to vector<6x256xf32>
    %6 = arith.addf %3, %5 : vector<6x256xf32>
    %c0_6 = arith.constant 0 : index
    %c0_7 = arith.constant 0 : index
    %c0_8 = arith.constant 0 : index
    %7 = vector.load %arg5[%c0_6, %c0_7, %c0_8] : memref<1x6x256xf32, #tpu.memory_space<vmem>>, vector<1x6x256xf32>
    %8 = vector.shape_cast %7 : vector<1x6x256xf32> to vector<6x256xf32>
    %9 = vector.shape_cast %6 : vector<6x256xf32> to vector<1x6x256xf32>
    tpu.vector_store %arg5[%c0_6, %c0_7, %c0_8], %9 {strides = array<i32>} : memref<1x6x256xf32, #tpu.memory_space<vmem>>, vector<1x6x256xf32>,
    return
  }
  func.func @transform_0(%arg0: i32, %arg1: i32) -> (i32, i32, i32) {
    %c0_i32 = arith.constant 0 : i32
    %c0_i32_0 = arith.constant 0 : i32
    return %arg0, %c0_i32, %arg1 : i32, i32, i32
  }
  func.func @transform_1(%arg0: i32, %arg1: i32) -> (i32, i32) {
    %c0_i32 = arith.constant 0 : i32
    %c0_i32_0 = arith.constant 0 : i32
    %c0_i32_1 = arith.constant 0 : i32
    return %c0_i32, %c0_i32_0 : i32, i32
  }
  func.func @transform_2(%arg0: i32, %arg1: i32) -> (i32, i32) {
    %c0_i32 = arith.constant 0 : i32
    %c0_i32_0 = arith.constant 0 : i32
    %c0_i32_1 = arith.constant 0 : i32
    return %c0_i32, %c0_i32_0 : i32, i32
  }
  func.func @transform_3(%arg0: i32, %arg1: i32) -> (i32, i32, i32) {
    %c0_i32 = arith.constant 0 : i32
    %c0_i32_0 = arith.constant 0 : i32
    return %arg0, %c0_i32, %arg1 : i32, i32, i32
  }
}

</mosaic_0001>

<llo_original>
// kernel: tpu_custom_call.1
$region0: #{tpu_custom_call.1}
  #allocation0 [shape = 'u32[]', space=smem, size = 0x4, offset = 0x4, fixed_abs, tag = 'smem constant byte address 0x4 - core index']
  #allocation1 [shape = 'u32[144,128]{1,0:T(1,128)}', space=vmem, size = 0x12000, scoped, tag = 'internal scratch']
  %s0 = inlined_call_operand.hbm [shape: f32[2,8,256], index: 0, kind: input, shape index: {}]
  %s1 = inlined_call_operand.vmem [shape: f32[6,8], index: 1, kind: input, shape index: {}]
  %s2 = inlined_call_operand.vmem [shape: f32[6,1], index: 2, kind: input, shape index: {}]
  %s3 = inlined_call_operand.vmem [shape: f32[2,6,256], index: 3, kind: output, shape index: {}]
  %s4 = sld [smem:[#allocation0]]
  $region49: #{tpu_custom_call.1} parent=0
    _
  %s6 = ssub.s32 1, %s4
  %s7 = scalar_select 0, %s6, %s4
  $region1: #{tpu_custom_call.1} parent=0
    #allocation2 [shape = 'u8[16384]{0}', space=vmem, size = 0x4000, scoped, tag = 'input window, operand 0']
    #allocation3 [shape = 's32[2]{0}', space=sflag, size = 0x8, scoped, tag = 'scoped memory for tpu_custom_call.1']
    %8 = vsyncpa [#allocation3], 0
    %s9 = scalar_lea.sflag [#allocation3], 1
    %10 = vsyncpa %s9, 0
    loop: start=0, step=1, limit=4
    $region2: #{tpu_custom_call.1} parent=1 // loop_pre_header
      _
    $region3: #{tpu_custom_call.1} parent=1 // loop_header
      %s12 = sphi 0, %s16
      %p13 = scmp.ge.s32.totalorder %s12, 4
      %s19 = sphi 0, %s31
      %s20 = sphi 0, %s27
      %s21 = sphi 0, %s19
      %s22 = sphi 0, %s20
      %s23 = sphi 0, %s21
      %s24 = sphi 0, %s22
      %s36 = sphi 0, %s38
      %s39 = sphi 0, %s36
      %s40 = sphi 0, %s39
      %s56 = sphi 0, %s40
      %s60 = sphi 0, %s60
      %s62 = sphi 0, %s60
      %s63 = sphi 0, %s62
      %s77 = sphi 0, %s63
      %s81 = sphi 0, %s81
      %s83 = sphi 0, %s81
      %s84 = sphi 0, %s83
      %s98 = sphi 0, %s84
      %s106 = sphi 0, %s108
      %s109 = sphi 0, %s106
      %s110 = sphi 0, %s109
      %s126 = sphi 0, %s110
    $region4: #{tpu_custom_call.1} parent=1 // loop_header_branch
      %15 = sbr.rel (%p13) target = $region8
    $region5: #{tpu_custom_call.1} parent=1 // loop_body
      %s17 = ssub.s32 %s12, 1
      %s18 = ssub.s32 %s12, 2
      %s25 = sadd.s32 1, %s20
      %p26 = scmp.ge.s32.totalorder %s25, 1
      %s27 = scalar_select %p26, 0, %s25
      %s28 = sadd.s32 1, %s19
      %s29 = scalar_select %p26, %s28, %s19
      %p30 = scmp.ge.s32.totalorder %s29, 2
      %s31 = scalar_select %p30, 0, %s29
      %s32 = ssub.s32 %s19, %s31
      %s33 = ssub.s32 %s20, %s27
      %s34 = sor.u32 %s32, %s33
      %p35 = scmp.eq.s32.totalorder %s34, 0
      %s37 = sadd.s32 %s36, 1
      %s38 = scalar_select %p35, %s36, %s37
      %p41 = pneg %p35
      %p42 = scmp.eq.s32.totalorder %s12, 1
      %p43 = por %p41, %p42
      %p44 = scmp.ne.s32.totalorder %s36, %s39
      %p45 = scmp.eq.s32.totalorder %s12, 0
      %p46 = por %p44, %p45
      %p47 = scmp.ne.s32.totalorder %s36, %s39
      %p48 = scmp.eq.s32.totalorder %s17, 1
      %p49 = por %p47, %p48
      %p50 = scmp.ne.s32.totalorder %s39, %s40
      %p51 = scmp.eq.s32.totalorder %s17, 0
      %p52 = por %p50, %p51
      %p53 = scmp.ne.s32.totalorder %s39, %s40
      %p54 = scmp.eq.s32.totalorder %s18, 1
      %p55 = por %p53, %p54
      %p57 = scmp.ne.s32.totalorder %s40, %s56
      %p58 = scmp.eq.s32.totalorder %s18, 0
      %p59 = por %p57, %p58
      %s61 = sadd.s32 %s60, 1
      %p64 = scmp.eq.s32.totalorder %s12, 1
      %p65 = scmp.ne.s32.totalorder %s60, %s62
      %p66 = scmp.eq.s32.totalorder %s12, 0
      %p67 = por %p65, %p66
      %p68 = scmp.ne.s32.totalorder %s60, %s62
      %p69 = scmp.eq.s32.totalorder %s17, 1
      %p70 = por %p68, %p69
      %p71 = scmp.ne.s32.totalorder %s62, %s63
      %p72 = scmp.eq.s32.totalorder %s17, 0
      %p73 = por %p71, %p72
      %p74 = scmp.ne.s32.totalorder %s62, %s63
      %p75 = scmp.eq.s32.totalorder %s18, 1
      %p76 = por %p74, %p75
      %p78 = scmp.ne.s32.totalorder %s63, %s77
      %p79 = scmp.eq.s32.totalorder %s18, 0
      %p80 = por %p78, %p79
      %s82 = sadd.s32 %s81, 1
      %p85 = scmp.eq.s32.totalorder %s12, 1
      %p86 = scmp.ne.s32.totalorder %s81, %s83
      %p87 = scmp.eq.s32.totalorder %s12, 0
      %p88 = por %p86, %p87
      %p89 = scmp.ne.s32.totalorder %s81, %s83
      %p90 = scmp.eq.s32.totalorder %s17, 1
      %p91 = por %p89, %p90
      %p92 = scmp.ne.s32.totalorder %s83, %s84
      %p93 = scmp.eq.s32.totalorder %s17, 0
      %p94 = por %p92, %p93
      %p95 = scmp.ne.s32.totalorder %s83, %s84
      %p96 = scmp.eq.s32.totalorder %s18, 1
      %p97 = por %p95, %p96
      %p99 = scmp.ne.s32.totalorder %s84, %s98
      %p100 = scmp.eq.s32.totalorder %s18, 0
      %p101 = por %p99, %p100
      %s102 = ssub.s32 %s19, %s31
      %s103 = ssub.s32 %s20, %s27
      %s104 = sor.u32 %s102, %s103
      %p105 = scmp.eq.s32.totalorder %s104, 0
      %s107 = sadd.s32 %s106, 1
      %s108 = scalar_select %p105, %s106, %s107
      %p111 = pneg %p105
      %p112 = scmp.eq.s32.totalorder %s12, 1
      %p113 = por %p111, %p112
      %p114 = scmp.ne.s32.totalorder %s106, %s109
      %p115 = scmp.eq.s32.totalorder %s12, 0
      %p116 = por %p114, %p115
      %p117 = scmp.ne.s32.totalorder %s106, %s109
      %p118 = scmp.eq.s32.totalorder %s17, 1
      %p119 = por %p117, %p118
      %p120 = scmp.ne.s32.totalorder %s109, %s110
      %p121 = scmp.eq.s32.totalorder %s17, 0
      %p122 = por %p120, %p121
      %p123 = scmp.ne.s32.totalorder %s109, %s110
      %p124 = scmp.eq.s32.totalorder %s18, 1
      %p125 = por %p123, %p124
      %p127 = scmp.ne.s32.totalorder %s110, %s126
      %p128 = scmp.eq.s32.totalorder %s18, 0
      %p129 = por %p127, %p128
      %p130 = scmp.le.s32.totalorder 1, %s12
      %p131 = scmp.lt.s32.totalorder %s12, 3
      %p132 = pnand %p130, %p131
      %p133 = pneg %p132
      // Predicated region
      $region9: #{tpu_custom_call.1} parent=5 // pred_check
        _
      $region10: #{tpu_custom_call.1} parent=5 // pred_check_branch
        %135 = sbr.rel (%p132) target = $region12
      $region11: #{tpu_custom_call.1} parent=5 // pred_region
        %s136 = ssub.s32 %s12, 1
        // Predicated region
        $region13: #{tpu_custom_call.1} parent=11 // pred_check
          %p137 = pneg %p73
        $region14: #{tpu_custom_call.1} parent=11 // pred_check_branch
          %139 = sbr.rel (%p137) target = $region16
        $region15: #{tpu_custom_call.1} parent=11 // pred_region
          _
        $region16: #{tpu_custom_call.1} parent=11 // pred_fallthru
          _
        // Predicated region
        $region17: #{tpu_custom_call.1} parent=11 // pred_check
          %p140 = pneg %p94
        $region18: #{tpu_custom_call.1} parent=11 // pred_check_branch
          %142 = sbr.rel (%p140) target = $region20
        $region19: #{tpu_custom_call.1} parent=11 // pred_region
          _
        $region20: #{tpu_custom_call.1} parent=11 // pred_fallthru
          _
      $region12: #{tpu_custom_call.1} parent=5 // pred_fallthru
        _
      %p143 = scmp.lt.s32.totalorder %s12, 2
      // Predicated region
      $region21: #{tpu_custom_call.1} parent=5 // pred_check
        %p144 = pneg %p143
      $region22: #{tpu_custom_call.1} parent=5 // pred_check_branch
        %146 = sbr.rel (%p144) target = $region24
      $region23: #{tpu_custom_call.1} parent=5 // pred_region
        // Predicated region
        $region25: #{tpu_custom_call.1} parent=23 // pred_check
          %p147 = pneg %p46
        $region26: #{tpu_custom_call.1} parent=23 // pred_check_branch
          %149 = sbr.rel (%p147) target = $region28
        $region27: #{tpu_custom_call.1} parent=23 // pred_region
          %s150 = sand.u32 %s36, 1
          %s151 = scalar_lea.sflag [#allocation3], %s150
          %s152 = sand.u32 %s36, 1
          %s153 = smul.addr %s152, 16
          %s154 = scalar_lea.vmem [#allocation2], %s153
          %s155 = smul.u32 2, %s20
          %s157 = ssub.s32 256, 256
          %158 = vsyncadd %s151, %s157
          %s159 = smul.addr %s19, 2
          %s160 = sadd.s32 %s155, %s159
          %s161 = smul.addr %s160, 128
          %s162 = scalar_lea.hbm %s0, %s161
          %s164 = sshll.u32 %s154, 4
          %s165 = int_to_ptr.vmem [resolvable:$true] %s164
          %167 = dma.hbm_to_vmem [thread:$0]  %s162, 256, %s165, %s151
        $region28: #{tpu_custom_call.1} parent=23 // pred_fallthru
          _
      $region24: #{tpu_custom_call.1} parent=5 // pred_fallthru
        _
      %p168 = scmp.le.s32.totalorder 1, %s12
      %p169 = scmp.lt.s32.totalorder %s12, 3
      %p170 = pnand %p168, %p169
      %p171 = pneg %p170
      // Predicated region
      $region29: #{tpu_custom_call.1} parent=5 // pred_check
        _
      $region30: #{tpu_custom_call.1} parent=5 // pred_check_branch
        %173 = sbr.rel (%p170) target = $region32
      $region31: #{tpu_custom_call.1} parent=5 // pred_region
        %s174 = ssub.s32 %s12, 1
        %s175 = sand.u32 %s39, 1
        %s176 = scalar_lea.sflag [#allocation3], %s175
        %s177 = sand.u32 %s39, 1
        %s178 = smul.addr %s177, 16
        %s179 = scalar_lea.vmem [#allocation2], %s178
        // Predicated region
        $region33: #{tpu_custom_call.1} parent=31 // pred_check
          %p180 = pneg %p52
        $region34: #{tpu_custom_call.1} parent=31 // pred_check_branch
          %182 = sbr.rel (%p180) target = $region36
        $region35: #{tpu_custom_call.1} parent=31 // pred_region
          %183 = dma.done %s176, 256
        $region36: #{tpu_custom_call.1} parent=31 // pred_fallthru
          _
        %s184 = sand.u32 %s39, 1
        %s185 = scalar_lea.sflag [#allocation3], %s184
        %s186 = sand.u32 %s39, 1
        %s187 = smul.addr %s186, 16
        %s188 = scalar_lea.vmem [#allocation2], %s187
        %p189 = pneg %p52
        %p190 = pneg %p49
        %p191 = pneg %p73
        %p192 = pneg %p70
        %p193 = pneg %p94
        %p194 = pneg %p91
        %p195 = pneg %p122
        %p196 = pneg %p119
        %s197 = smul.u32 2, %s22
        %p198 = scmp.lt.s32.totalorder %s21, 1
        %s199 = scalar_select %p198, %s21, 1
        %p200 = scmp.lt.s32.totalorder %s197, 1
        %s201 = scalar_select %p200, %s197, 1
        %s202 = smul.addr %s199, 2
        %s203 = sadd.s32 %s201, %s202
        %s204 = smul.addr %s203, 8
        %s205 = scalar_lea.vmem %s3, %s204
        %s206 = smul.u32 2, %s22
        %s207 = smul.u32 2, %s22
        %p208 = scmp.lt.s32.totalorder %s21, 1
        %s209 = scalar_select %p208, %s21, 1
        %p210 = scmp.lt.s32.totalorder %s207, 1
        %s211 = scalar_select %p210, %s207, 1
        %s212 = smul.addr %s209, 2
        %s213 = sadd.s32 %s211, %s212
        %s214 = smul.addr %s213, 8
        %s215 = scalar_lea.vmem %s3, %s214
        %s216 = smul.u32 2, %s22
        %v217 = vld [vmem:[%s1] sm:$0x3f]
        %v218 = vld [vmem:[%s179] sm:$0xff]
        %v219 = vld [vmem:[%s179 + $0x8] sm:$0xff]
        %v220 = vld [vmem:[%s2] sm:$0x3f]
        %222 = vset.pattern.permute.xlu0 0
        %223 = vperm.xlu0 %222, %v220
        %v224 = vpop.permute.xlu0 %223
        %vm226 = vcmask 64512
        %v228 = vsel %vm226, %v217, 0
        %230 = vmatprep.subr.mxu0 0.0
        %231 = vmatpush1.msra.mxu0 0.0
        %232 = vmatprep.subr.mxu0 0.0
        %233 = vmatpush1.msra.mxu0 0.0
        %234 = vmatprep.subr.mxu0 0.0
        %235 = vmatpush1.msra.mxu0 0.0
        %236 = vmatprep.subr.mxu0 0.0
        %237 = vmatpush1.msra.mxu0 0.0
        %238 = vmatprep.subr.mxu0 0.0
        %239 = vmatpush1.msra.mxu0 0.0
        %240 = vmatprep.subr.mxu0 0.0
        %241 = vmatpush1.msra.mxu0 0.0
        %242 = vmatprep.subr.mxu0 0.0
        %243 = vmatpush1.msra.mxu0 0.0
        %244 = vmatprep.subr.mxu0 0.0
        %245 = vmatpush1.msra.mxu0 0.0
        %246 = vmatprep.subr.mxu0 0.0
        %247 = vmatpush1.msra.mxu0 0.0
        %248 = vmatprep.subr.mxu0 0.0
        %249 = vmatpush1.msra.mxu0 0.0
        %250 = vmatprep.subr.mxu0 0.0
        %251 = vmatpush1.msra.mxu0 0.0
        %252 = vmatprep.subr.mxu0 0.0
        %253 = vmatpush1.msra.mxu0 0.0
        %254 = vmatprep.subr.mxu0 0.0
        %255 = vmatpush1.msra.mxu0 0.0
        %256 = vmatprep.subr.mxu0 0.0
        %257 = vmatpush1.msra.mxu0 0.0
        %258 = vmatprep.subr.mxu0 0.0
        %259 = vmatpush1.msra.mxu0 0.0
        %260 = vmatprep.subr.mxu0 %v219
        %261 = vmatpush1.msra.mxu0 %v218
        %262 = vmatprep.subr.mxu0 0.0
        %263 = vmatpush2.msra.mxu0 0.0
        %264 = vmatprep.subr.mxu0 0.0
        %265 = vmatpush2.msra.mxu0 0.0
        %266 = vmatprep.subr.mxu0 0.0
        %267 = vmatpush2.msra.mxu0 0.0
        %268 = vmatprep.subr.mxu0 0.0
        %269 = vmatpush2.msra.mxu0 0.0
        %270 = vmatprep.subr.mxu0 0.0
        %271 = vmatpush2.msra.mxu0 0.0
        %272 = vmatprep.subr.mxu0 0.0
        %273 = vmatpush2.msra.mxu0 0.0
        %274 = vmatprep.subr.mxu0 0.0
        %275 = vmatpush2.msra.mxu0 0.0
        %276 = vmatprep.subr.mxu0 0.0
        %277 = vmatpush2.msra.mxu0 0.0
        %278 = vmatprep.subr.mxu0 0.0
        %279 = vmatpush2.msra.mxu0 0.0
        %280 = vmatprep.subr.mxu0 0.0
        %281 = vmatpush2.msra.mxu0 0.0
        %282 = vmatprep.subr.mxu0 0.0
        %283 = vmatpush2.msra.mxu0 0.0
        %284 = vmatprep.subr.mxu0 0.0
        %285 = vmatpush2.msra.mxu0 0.0
        %286 = vmatprep.subr.mxu0 0.0
        %287 = vmatpush2.msra.mxu0 0.0
        %288 = vmatprep.subr.mxu0 0.0
        %289 = vmatpush2.msra.mxu0 0.0
        %290 = vmatprep.subr.mxu0 0.0
        %291 = vmatpush2.msra.mxu0 0.0
        %292 = vmatprep.subr.mxu0 0.0
        %293 = vmatpush2.msra.mxu0 0.0
        %294 = vmatprep.mubr.f32.mxu0 0.0
        %295 = vmatmul.mubr.f32.gmra.mxu0 %v228
        %v296 = vpop.f32.mrf.mxu0
        %v297 = vadd.f32 %v224, %v296
        %v298 = vpop.f32.mrf.mxu0
        %v299 = vadd.f32 %v224, %v298
        %300 = vdwg.mxu0
        %301 = vst [vmem:[%s215] sm:$0x3f] %v297
        %302 = vst [vmem:[%s215 + $0x8] sm:$0x3f] %v299
        %s303 = smul.u32 2, %s22
        %p304 = scmp.lt.s32.totalorder %s21, 1
        %s305 = scalar_select %p304, %s21, 1
        %p306 = scmp.lt.s32.totalorder %s303, 1
        %s307 = scalar_select %p306, %s303, 1
        %s308 = smul.addr %s305, 2
        %s309 = sadd.s32 %s307, %s308
        %s310 = smul.addr %s309, 8
        %s311 = scalar_lea.vmem %s3, %s310
        // Predicated region
        $region37: #{tpu_custom_call.1} parent=31 // pred_check
          %p312 = pneg %p119
        $region38: #{tpu_custom_call.1} parent=31 // pred_check_branch
          %314 = sbr.rel (%p312) target = $region40
        $region39: #{tpu_custom_call.1} parent=31 // pred_region
          %s315 = smul.u32 2, %s22
        $region40: #{tpu_custom_call.1} parent=31 // pred_fallthru
          _
      $region32: #{tpu_custom_call.1} parent=5 // pred_fallthru
        _
      %p316 = scmp.le.s32.totalorder 2, %s12
      // Predicated region
      $region41: #{tpu_custom_call.1} parent=5 // pred_check
        %p317 = pneg %p316
      $region42: #{tpu_custom_call.1} parent=5 // pred_check_branch
        %319 = sbr.rel (%p317) target = $region44
      $region43: #{tpu_custom_call.1} parent=5 // pred_region
        %s320 = ssub.s32 %s12, 2
        // Predicated region
        $region45: #{tpu_custom_call.1} parent=43 // pred_check
          %p321 = pneg %p125
        $region46: #{tpu_custom_call.1} parent=43 // pred_check_branch
          %323 = sbr.rel (%p321) target = $region48
        $region47: #{tpu_custom_call.1} parent=43 // pred_region
          %s324 = smul.u32 2, %s24
          %p325 = scmp.lt.s32.totalorder %s23, 1
          %s326 = scalar_select %p325, %s23, 1
          %p327 = scmp.lt.s32.totalorder %s324, 1
          %s328 = scalar_select %p327, %s324, 1
          %s329 = smul.addr %s326, 2
          %s330 = sadd.s32 %s328, %s329
          %s331 = smul.addr %s330, 8
          %s332 = scalar_lea.vmem %s3, %s331
        $region48: #{tpu_custom_call.1} parent=43 // pred_fallthru
          _
      $region44: #{tpu_custom_call.1} parent=5 // pred_fallthru
        _
    $region6: #{tpu_custom_call.1} parent=1 // loop_footer
      %s16 = sadd.s32 1, %s12
    $region7: #{tpu_custom_call.1} parent=1 // loop_footer_branch
      %11 = sbr.rel target = $region3
    $region8: #{tpu_custom_call.1} parent=1 // loop_exit
      _
    %333 = vsyncpa [#allocation3], 1
    %s334 = scalar_lea.sflag [#allocation3], 1
    %335 = vsyncpa %s334, 1

</llo_original>
